<compile_context>
chip_gen: v7x
topology: tpu7x:2x2x1
jax: 0.10.0
libtpu: 0.0.40
codegen_flags: <defaults>
</compile_context>

<pallas_src>
import functools

import jax
import jax.numpy as jnp
from jax.experimental import pallas as pl
from jax.experimental.pallas import tpu as pltpu


def _round_up(x: int, m: int) -> int:
    return ((x + m - 1) // m) * m


def _layernorm_pre_kernel(x_ref, o_ref, *, eps, d_true, d_pad):
    # x_ref / o_ref: (tm, d_pad) VMEM tiles. The reduction is over the lane
    # (last) dim, fully contained in every block, so grid steps are
    # independent and partial-block pad rows never contaminate valid rows.
    x = x_ref[...].astype(jnp.float32)
    inv_d = jnp.float32(1.0 / d_true)
    mean = jnp.sum(x, axis=-1, keepdims=True) * inv_d
    xc = x - mean
    if d_pad != d_true:
        # Zero the pad lanes so they do not contribute to the variance (the
        # padded input columns are zero, but after centering they'd be -mean).
        lane = jax.lax.broadcasted_iota(jnp.int32, xc.shape, xc.ndim - 1)
        xc = jnp.where(lane < d_true, xc, 0.0)
    var = jnp.sum(xc * xc, axis=-1, keepdims=True) * inv_d
    inv = jax.lax.rsqrt(var + eps)  # EUP rsqrt: separate bundle slot, ~free
    o_ref[...] = (xc * inv).astype(o_ref.dtype)


def layernorm_pre(x, eps: float = 1e-5, *, max_block_rows: int = 1024,
                  min_grid_steps: int = 8):
    """LayerNormPre forward: center and scale over the last dim of x.

    x: (..., D) array. Returns an array of the same shape and dtype.
    """
    orig_shape = x.shape
    D = orig_shape[-1]
    N = 1
    for s in orig_shape[:-1]:
        N *= s

    itemsize = jnp.dtype(x.dtype).itemsize
    # Packed-sublane multiple: 8 for f32, 16 for bf16, 32 for int8/fp8.
    sub = max(8, 32 // itemsize)

    # Pad the reduction dim to a lane-dense multiple of 128 so every store is
    # an unmasked vst (the biggest single perf lever for small d_model).
    D_pad = _round_up(D, 128)
    x2 = x.reshape(N, D)
    if D_pad != D:
        x2 = jnp.pad(x2, ((0, 0), (0, D_pad - D)))

    # Generation-aware VMEM budgeting.
    try:
        vmem_cap = int(pltpu.get_tpu_info().vmem_capacity_bytes)
    except Exception:  # no chip / old runtime: assume smallest (v7x, 64 MiB)
        vmem_cap = 64 * 1024 * 1024
    # in+out double-buffered = 4 tile-sized buffers; leave headroom for f32
    # kernel temporaries. Cap each pipelined buffer at 8 MiB.
    per_buf_bytes = min(8 << 20, (vmem_cap * 2 // 5) // 4)
    vmem_limit = int(min(vmem_cap * 3 // 4, 96 << 20))

    # Rows per block: budget as-if f32 elements (covers in-kernel temps),
    # bounded by max_block_rows and N.
    row_bytes = D_pad * max(itemsize, 4)
    tm = min(N, max_block_rows, max(sub, per_buf_bytes // max(row_bytes, 1)))

    # Keep enough grid depth for DMA/compute overlap and megacore sharding
    # (v7x shards the "parallel" axis across its 2 TensorCores).
    if N > sub:
        depth_cap = _round_up(pl.cdiv(N, min_grid_steps), sub)
        tm = min(tm, max(sub, depth_cap))

    if tm < N:
        # Second-minor block dim must be a multiple of the sublane packing
        # when it does not cover the full row extent.
        tm = max(sub, (tm // sub) * sub)
    grid = (pl.cdiv(N, tm),)

    kernel = functools.partial(_layernorm_pre_kernel, eps=float(eps),
                               d_true=D, d_pad=D_pad)

    cost = pl.CostEstimate(
        flops=6 * N * D,                       # subtract, square, 2 reductions, scale
        transcendentals=N,                     # one rsqrt per row
        bytes_accessed=2 * N * D * itemsize,   # read x, write out
    )

    out = pl.pallas_call(
        kernel,
        out_shape=jax.ShapeDtypeStruct((N, D_pad), x.dtype),
        grid_spec=pltpu.PrefetchScalarGridSpec(
            num_scalar_prefetch=0,
            grid=grid,
            in_specs=[pl.BlockSpec((tm, D_pad), lambda i: (i, 0))],
            out_specs=pl.BlockSpec((tm, D_pad), lambda i: (i, 0)),
        ),
        compiler_params=pltpu.CompilerParams(
            # Row tiles are fully independent: pipeline + megacore sharding.
            dimension_semantics=("parallel",),
            vmem_limit_bytes=vmem_limit,
        ),
        cost_estimate=cost,
    )(x2)

    if D_pad != D:
        out = out[:, :D]
    return out.reshape(orig_shape)


def _reference(x, eps):
    xc = x - jnp.mean(x, axis=-1, keepdims=True)
    scale = jnp.sqrt(jnp.mean(xc * xc, axis=-1, keepdims=True) + eps)
    return xc / scale


if __name__ == "__main__":
    eps = 1e-5
    key = jax.random.PRNGKey(0)
    k0, k1 = jax.random.split(key)

    # Residual-stream shape (batch, pos, d_model) — small, non-lane-dense
    # d_model exercises the pad-to-128 path.
    x_small = jax.random.normal(k0, (2, 8, 32), dtype=jnp.float32)
    out_small = jax.block_until_ready(layernorm_pre(x_small, eps=eps))
    assert out_small.shape == x_small.shape and out_small.dtype == x_small.dtype
    assert jnp.allclose(out_small, _reference(x_small, eps), rtol=1e-5, atol=1e-5), \
        "mismatch vs reference (padded-D path)"

    # Lane-dense d_model exercises the unpadded fast path.
    x_dense = jax.random.normal(k1, (2, 8, 128), dtype=jnp.float32)
    out_dense = jax.block_until_ready(layernorm_pre(x_dense, eps=eps))
    assert jnp.allclose(out_dense, _reference(x_dense, eps), rtol=1e-5, atol=1e-5), \
        "mismatch vs reference (lane-dense path)"

    # TODO(synk): hook_scale / hook_normalized are inference-time identity
    # HookPoints; no Pallas equivalent needed for the forward value.
    print("KERNEL_OK")
</pallas_src>

<mosaic_0001>
module attributes {stable_mosaic.version = 11 : i64} {
  func.func @_layernorm_pre_kernel(%arg0: i32, %arg1: memref<8x128xf32, #tpu.memory_space<vmem>>, %arg2: memref<8x128xf32, #tpu.memory_space<vmem>>) attributes {dimension_semantics = [#tpu.dimension_semantics<parallel>], iteration_bounds = array<i64: 2>, scalar_prefetch = 0 : i64, scratch_operands = 0 : i64, tpu.core_type = #tpu.core_type<tc>, window_params = [{transform_indices = @transform_0, window_bounds = array<i64: 8, 128>}, {transform_indices = @transform_1, window_bounds = array<i64: 8, 128>}]} {
    %c0 = arith.constant 0 : index
    %c0_0 = arith.constant 0 : index
    %0 = vector.load %arg1[%c0, %c0_0] : memref<8x128xf32, #tpu.memory_space<vmem>>, vector<8x128xf32>
    %cst = arith.constant dense<0.000000e+00> : vector<8xf32>
    %1 = vector.multi_reduction <add>, %0, %cst [1] : vector<8x128xf32> to vector<8xf32>
    %2 = vector.shape_cast %1 : vector<8xf32> to vector<8x1xf32>
    %cst_1 = arith.constant 3.125000e-02 : f32
    %3 = vector.broadcast %cst_1 : f32 to vector<8x1xf32>
    %4 = arith.mulf %2, %3 : vector<8x1xf32>
    %5 = vector.broadcast %4 : vector<8x1xf32> to vector<8x128xf32>
    %6 = arith.subf %0, %5 : vector<8x128xf32>
    %7 = tpu.iota {dimensions = array<i32: 1>} : vector<8x128xi32>
    %c32_i32 = arith.constant 32 : i32
    %8 = vector.broadcast %c32_i32 : i32 to vector<8x128xi32>
    %9 = arith.cmpi slt, %7, %8 : vector<8x128xi32>
    %cst_2 = arith.constant 0.000000e+00 : f32
    %10 = vector.broadcast %cst_2 : f32 to vector<8x128xf32>
    %11 = arith.select %9, %6, %10 : vector<8x128xi1>, vector<8x128xf32>
    %12 = arith.mulf %11, %11 : vector<8x128xf32>
    %cst_3 = arith.constant dense<0.000000e+00> : vector<8xf32>
    %13 = vector.multi_reduction <add>, %12, %cst_3 [1] : vector<8x128xf32> to vector<8xf32>
    %14 = vector.shape_cast %13 : vector<8xf32> to vector<8x1xf32>
    %cst_4 = arith.constant 3.125000e-02 : f32
    %15 = vector.broadcast %cst_4 : f32 to vector<8x1xf32>
    %16 = arith.mulf %14, %15 : vector<8x1xf32>
    %cst_5 = arith.constant 9.99999974E-6 : f32
    %17 = vector.broadcast %cst_5 : f32 to vector<8x1xf32>
    %18 = arith.addf %16, %17 : vector<8x1xf32>
    %19 = math.rsqrt %18 : vector<8x1xf32>
    %20 = vector.broadcast %19 : vector<8x1xf32> to vector<8x128xf32>
    %21 = arith.mulf %11, %20 : vector<8x128xf32>
    %c0_6 = arith.constant 0 : index
    %c0_7 = arith.constant 0 : index
    %22 = vector.load %arg2[%c0_6, %c0_7] : memref<8x128xf32, #tpu.memory_space<vmem>>, vector<8x128xf32>
    tpu.vector_store %arg2[%c0_6, %c0_7], %21 {strides = array<i32>} : memref<8x128xf32, #tpu.memory_space<vmem>>, vector<8x128xf32>,
    return
  }
  func.func @transform_0(%arg0: i32) -> (i32, i32) {
    %c0_i32 = arith.constant 0 : i32
    %c0_i32_0 = arith.constant 0 : i32
    return %arg0, %c0_i32 : i32, i32
  }
  func.func @transform_1(%arg0: i32) -> (i32, i32) {
    %c0_i32 = arith.constant 0 : i32
    %c0_i32_0 = arith.constant 0 : i32
    return %arg0, %c0_i32 : i32, i32
  }
}

</mosaic_0001>

<llo_original>
// kernel: tpu_custom_call.1
$region0: #{tpu_custom_call.1}
  #allocation0 [shape = 'u32[]', space=smem, size = 0x4, offset = 0x4, fixed_abs, tag = 'smem constant byte address 0x4 - core index']
  #allocation1 [shape = 'u32[144,128]{1,0:T(1,128)}', space=vmem, size = 0x12000, scoped, tag = 'internal scratch']
  %s0 = inlined_call_operand.hbm [shape: f32[16,128], index: 0, kind: input, shape index: {}]
  %s1 = inlined_call_operand.hbm [shape: f32[16,128], index: 1, kind: output, shape index: {}]
  %s2 = sld [smem:[#allocation0]]
  $region41: #{tpu_custom_call.1} parent=0
    _
  %s4 = ssub.s32 1, %s2
  %s5 = scalar_select 0, %s4, %s2
  $region1: #{tpu_custom_call.1} parent=0
    #allocation2 [shape = 'u8[8192]{0}', space=vmem, size = 0x2000, scoped, tag = 'input window, operand 0']
    #allocation3 [shape = 's32[2]{0}', space=sflag, size = 0x8, scoped, tag = 'scoped memory for tpu_custom_call.1']
    #allocation4 [shape = 's32[2]{0}', space=sflag, size = 0x8, scoped, tag = 'scoped memory for tpu_custom_call.1']
    #allocation5 [shape = 'u8[8192]{0}', space=vmem, size = 0x2000, scoped, tag = 'output window, operand 0']
    %6 = vsyncpa [#allocation3], 0
    %s7 = scalar_lea.sflag [#allocation3], 1
    %8 = vsyncpa %s7, 0
    %9 = vsyncpa [#allocation4], 0
    %s10 = scalar_lea.sflag [#allocation4], 1
    %11 = vsyncpa %s10, 0
    loop: start=0, step=1, limit=4
    $region2: #{tpu_custom_call.1} parent=1 // loop_pre_header
      _
    $region3: #{tpu_custom_call.1} parent=1 // loop_header
      %s13 = sphi 0, %s17
      %p14 = scmp.ge.s32.totalorder %s13, 4
      %s23 = sphi 0, %s25
      %s26 = sphi 0, %s23
      %s27 = sphi 0, %s26
      %s43 = sphi 0, %s27
      %s49 = sphi 0, %s51
      %s52 = sphi 0, %s49
      %s53 = sphi 0, %s52
      %s69 = sphi 0, %s53
    $region4: #{tpu_custom_call.1} parent=1 // loop_header_branch
      %16 = sbr.rel (%p14) target = $region8
    $region5: #{tpu_custom_call.1} parent=1 // loop_body
      %s18 = ssub.s32 %s13, 1
      %s19 = ssub.s32 %s13, 2
      %s20 = sadd.s32 %s13, 1
      %s21 = ssub.s32 %s13, %s20
      %p22 = scmp.eq.s32.totalorder %s21, 0
      %s24 = sadd.s32 %s23, 1
      %s25 = scalar_select %p22, %s23, %s24
      %p28 = pneg %p22
      %p29 = scmp.eq.s32.totalorder %s13, 1
      %p30 = por %p28, %p29
      %p31 = scmp.ne.s32.totalorder %s23, %s26
      %p32 = scmp.eq.s32.totalorder %s13, 0
      %p33 = por %p31, %p32
      %p34 = scmp.ne.s32.totalorder %s23, %s26
      %p35 = scmp.eq.s32.totalorder %s18, 1
      %p36 = por %p34, %p35
      %p37 = scmp.ne.s32.totalorder %s26, %s27
      %p38 = scmp.eq.s32.totalorder %s18, 0
      %p39 = por %p37, %p38
      %p40 = scmp.ne.s32.totalorder %s26, %s27
      %p41 = scmp.eq.s32.totalorder %s19, 1
      %p42 = por %p40, %p41
      %p44 = scmp.ne.s32.totalorder %s27, %s43
      %p45 = scmp.eq.s32.totalorder %s19, 0
      %p46 = por %p44, %p45
      %s47 = ssub.s32 %s13, %s20
      %p48 = scmp.eq.s32.totalorder %s47, 0
      %s50 = sadd.s32 %s49, 1
      %s51 = scalar_select %p48, %s49, %s50
      %p54 = pneg %p48
      %p55 = scmp.eq.s32.totalorder %s13, 1
      %p56 = por %p54, %p55
      %p57 = scmp.ne.s32.totalorder %s49, %s52
      %p58 = scmp.eq.s32.totalorder %s13, 0
      %p59 = por %p57, %p58
      %p60 = scmp.ne.s32.totalorder %s49, %s52
      %p61 = scmp.eq.s32.totalorder %s18, 1
      %p62 = por %p60, %p61
      %p63 = scmp.ne.s32.totalorder %s52, %s53
      %p64 = scmp.eq.s32.totalorder %s18, 0
      %p65 = por %p63, %p64
      %p66 = scmp.ne.s32.totalorder %s52, %s53
      %p67 = scmp.eq.s32.totalorder %s19, 1
      %p68 = por %p66, %p67
      %p70 = scmp.ne.s32.totalorder %s53, %s69
      %p71 = scmp.eq.s32.totalorder %s19, 0
      %p72 = por %p70, %p71
      %p73 = scmp.le.s32.totalorder 1, %s13
      %p74 = scmp.lt.s32.totalorder %s13, 3
      %p75 = pnand %p73, %p74
      %p76 = pneg %p75
      // Predicated region
      $region9: #{tpu_custom_call.1} parent=5 // pred_check
        _
      $region10: #{tpu_custom_call.1} parent=5 // pred_check_branch
        %78 = sbr.rel (%p75) target = $region12
      $region11: #{tpu_custom_call.1} parent=5 // pred_region
        %s79 = ssub.s32 %s13, 1
      $region12: #{tpu_custom_call.1} parent=5 // pred_fallthru
        _
      %p80 = scmp.lt.s32.totalorder %s13, 2
      // Predicated region
      $region13: #{tpu_custom_call.1} parent=5 // pred_check
        %p81 = pneg %p80
      $region14: #{tpu_custom_call.1} parent=5 // pred_check_branch
        %83 = sbr.rel (%p81) target = $region16
      $region15: #{tpu_custom_call.1} parent=5 // pred_region
        // Predicated region
        $region17: #{tpu_custom_call.1} parent=15 // pred_check
          %p84 = pneg %p33
        $region18: #{tpu_custom_call.1} parent=15 // pred_check_branch
          %86 = sbr.rel (%p84) target = $region20
        $region19: #{tpu_custom_call.1} parent=15 // pred_region
          %s87 = sand.u32 %s23, 1
          %s88 = scalar_lea.sflag [#allocation3], %s87
          %s89 = sand.u32 %s23, 1
          %s90 = smul.addr %s89, 8
          %s91 = scalar_lea.vmem [#allocation2], %s90
          %s93 = ssub.s32 128, 128
          %94 = vsyncadd %s88, %s93
          %s95 = smul.addr %s13, 128
          %s96 = scalar_lea.hbm %s0, %s95
          %s98 = sshll.u32 %s91, 4
          %s99 = int_to_ptr.vmem [resolvable:$true] %s98
          %101 = dma.hbm_to_vmem [thread:$0]  %s96, 128, %s99, %s88
        $region20: #{tpu_custom_call.1} parent=15 // pred_fallthru
          _
      $region16: #{tpu_custom_call.1} parent=5 // pred_fallthru
        _
      %p102 = scmp.le.s32.totalorder 1, %s13
      %p103 = scmp.lt.s32.totalorder %s13, 3
      %p104 = pnand %p102, %p103
      %p105 = pneg %p104
      // Predicated region
      $region21: #{tpu_custom_call.1} parent=5 // pred_check
        _
      $region22: #{tpu_custom_call.1} parent=5 // pred_check_branch
        %107 = sbr.rel (%p104) target = $region24
      $region23: #{tpu_custom_call.1} parent=5 // pred_region
        %s108 = ssub.s32 %s13, 1
        %s109 = sand.u32 %s26, 1
        %s110 = scalar_lea.sflag [#allocation3], %s109
        %s111 = sand.u32 %s26, 1
        %s112 = smul.addr %s111, 8
        %s113 = scalar_lea.vmem [#allocation2], %s112
        // Predicated region
        $region25: #{tpu_custom_call.1} parent=23 // pred_check
          %p114 = pneg %p39
        $region26: #{tpu_custom_call.1} parent=23 // pred_check_branch
          %116 = sbr.rel (%p114) target = $region28
        $region27: #{tpu_custom_call.1} parent=23 // pred_region
          %117 = dma.done %s110, 128
        $region28: #{tpu_custom_call.1} parent=23 // pred_fallthru
          _
        %s118 = sand.u32 %s26, 1
        %s119 = scalar_lea.sflag [#allocation3], %s118
        %s120 = sand.u32 %s26, 1
        %s121 = smul.addr %s120, 8
        %s122 = scalar_lea.vmem [#allocation2], %s121
        %p123 = pneg %p39
        %p124 = pneg %p36
        %p125 = pneg %p65
        %p126 = pneg %p62
        %s127 = sand.u32 %s52, 1
        %s128 = scalar_lea.sflag [#allocation4], %s127
        %s129 = sand.u32 %s52, 1
        %s130 = smul.addr %s129, 8
        %s131 = scalar_lea.vmem [#allocation5], %s130
        %v132 = vld [vmem:[%s113] sm:$0xff]
        %133 = vadd.xlane.f32.xlu0 %v132
        %v134 = vpop.xlane.xlu0 %133
        %v135 = vmul.f32 %v134, 0.03125
        %v136 = vsub.f32 %v132, %v135
        %v137 = vlaneseq
        %v138 = vand.u32 %v137, 127
        %vm139 = vcmp.lt.s32.totalorder %v138, 32
        %v140 = vsel %vm139, %v136, 0.0
        %v141 = vmul.f32 %v140, %v140
        %142 = vadd.xlane.f32.xlu0 %v141
        %v143 = vpop.xlane.xlu0 %142
        %v144 = vmul.f32 %v143, 0.03125
        %v145 = vadd.f32 %v144, 1e-05
        %v146 = vrsqrt.pop %v145
        %v147 = vmul.f32 %v140, %v146
        %148 = vst [vmem:[%s131] sm:$0xff] %v147
        %s149 = sand.u32 %s52, 1
        %s150 = scalar_lea.sflag [#allocation4], %s149
        %s151 = sand.u32 %s52, 1
        %s152 = smul.addr %s151, 8
        %s153 = scalar_lea.vmem [#allocation5], %s152
        // Predicated region
        $region29: #{tpu_custom_call.1} parent=23 // pred_check
          %p154 = pneg %p62
        $region30: #{tpu_custom_call.1} parent=23 // pred_check_branch
          %156 = sbr.rel (%p154) target = $region32
        $region31: #{tpu_custom_call.1} parent=23 // pred_region
          %s158 = ssub.s32 128, 128
          %159 = vsyncadd %s150, %s158
          %s160 = smul.addr %s18, 128
          %s161 = scalar_lea.hbm %s1, %s160
          %s163 = sshll.u32 %s153, 4
          %s164 = int_to_ptr.vmem [resolvable:$true] %s163
          %166 = dma.vmem_to_hbm [thread:$0]  %s164, 128, %s161, %s150
        $region32: #{tpu_custom_call.1} parent=23 // pred_fallthru
          _
      $region24: #{tpu_custom_call.1} parent=5 // pred_fallthru
        _
      %p167 = scmp.le.s32.totalorder 2, %s13
      // Predicated region
      $region33: #{tpu_custom_call.1} parent=5 // pred_check
        %p168 = pneg %p167
      $region34: #{tpu_custom_call.1} parent=5 // pred_check_branch
        %170 = sbr.rel (%p168) target = $region36
      $region35: #{tpu_custom_call.1} parent=5 // pred_region
        %s171 = ssub.s32 %s13, 2
        // Predicated region
        $region37: #{tpu_custom_call.1} parent=35 // pred_check
          %p172 = pneg %p68
        $region38: #{tpu_custom_call.1} parent=35 // pred_check_branch
          %174 = sbr.rel (%p172) target = $region40
        $region39: #{tpu_custom_call.1} parent=35 // pred_region
          %s175 = sand.u32 %s53, 1
          %s176 = scalar_lea.sflag [#allocation4], %s175
          %s177 = sand.u32 %s53, 1
          %s178 = smul.addr %s177, 8
          %s179 = scalar_lea.vmem [#allocation5], %s178
          %180 = dma.done %s176, 128
        $region40: #{tpu_custom_call.1} parent=35 // pred_fallthru
          _
      $region36: #{tpu_custom_call.1} parent=5 // pred_fallthru
        _
    $region6: #{tpu_custom_call.1} parent=1 // loop_footer
      %s17 = sadd.s32 1, %s13
    $region7: #{tpu_custom_call.1} parent=1 // loop_footer_branch
      %12 = sbr.rel target = $region3
    $region8: #{tpu_custom_call.1} parent=1 // loop_exit
      _
    %181 = vsyncpa [#allocation3], 1
    %s182 = scalar_lea.sflag [#allocation3], 1
    %183 = vsyncpa %s182, 1
    %184 = vsyncpa [#allocation4], 1
    %s185 = scalar_lea.sflag [#allocation4], 1
    %186 = vsyncpa %s185, 1

</llo_original>
